<compile_context>
chip_gen: v6e
topology: v6e:2x2x1
jax: 0.10.0
libtpu: 0.0.40
codegen_flags: <defaults>
</compile_context>

<pallas_src>
import functools

import jax
import jax.numpy as jnp
from jax import lax
from jax.experimental import pallas as pl
from jax.experimental.pallas import tpu as pltpu


def _round_up(n, m):
    return ((n + m - 1) // m) * m


def _layernorm_kernel(x_ref, w_ref, b_ref, o_ref, *, eps, inv_d, chunk_rows,
                      num_chunks):
    # Affine params: load once per grid step, promote to f32.
    w = w_ref[...].astype(jnp.float32)          # (1, D)
    b = b_ref[...].astype(jnp.float32)          # (1, D)

    def body(c, carry):
        r0 = pl.multiple_of(c * chunk_rows, chunk_rows)
        x = x_ref[pl.ds(r0, chunk_rows), :].astype(jnp.float32)   # (cr, D)
        mean = jnp.sum(x, axis=-1, keepdims=True) * inv_d         # (cr, 1)
        centered = x - mean
        var = jnp.sum(centered * centered, axis=-1, keepdims=True) * inv_d
        inv_std = lax.rsqrt(var + eps)                            # EUP rsqrt
        o_ref[pl.ds(r0, chunk_rows), :] = (
            centered * inv_std * w + b).astype(o_ref.dtype)
        return carry

    lax.fori_loop(0, num_chunks, body, 0, unroll=True)


def layernorm_forward(x, w, b, *, eps=1e-5, block_rows=2048, chunk_rows=256):
    """x: [batch, position, d_model] -> same shape/dtype, LayerNorm'd."""
    B, S, D = x.shape
    rows = B * S
    x2 = x.reshape(rows, D)
    w2 = w.reshape(1, D)
    b2 = b.reshape(1, D)

    # Sublane granularity: 8 rows for 32-bit dtypes, 16 for packed (bf16 etc.).
    row_align = 8 if x.dtype.itemsize >= 4 else 16

    # Pick the row tile `br`.
    if rows <= block_rows:
        if rows >= 2 * row_align:
            # Small-input path: >= 2 grid steps so v7x's two TCs both get work.
            br = _round_up(pl.cdiv(rows, 2), row_align)
        else:
            br = _round_up(rows, row_align)
    else:
        # Large-input path: big tile, rounded so the in-kernel chunking divides
        # it exactly (chunk_rows itself is kept a multiple of row_align).
        cr_big = max(row_align, (chunk_rows // row_align) * row_align)
        br = max(cr_big, (block_rows // cr_big) * cr_big)

    # In-kernel chunk size must evenly divide the block.
    cr = max(row_align, (chunk_rows // row_align) * row_align)
    if br % cr != 0:
        cr = br            # small blocks: process the whole tile in one chunk
    num_chunks = br // cr

    grid = (pl.cdiv(rows, br),)

    kernel = functools.partial(
        _layernorm_kernel,
        eps=float(eps),
        inv_d=1.0 / float(D),
        chunk_rows=int(cr),
        num_chunks=int(num_chunks),
    )

    out = pl.pallas_call(
        kernel,
        out_shape=jax.ShapeDtypeStruct((rows, D), x.dtype),
        grid_spec=pltpu.PrefetchScalarGridSpec(
            num_scalar_prefetch=0,
            grid=grid,
            in_specs=[
                pl.BlockSpec((br, D), lambda i: (i, 0)),   # x row tile
                pl.BlockSpec((1, D), lambda i: (0, 0)),    # w (broadcast)
                pl.BlockSpec((1, D), lambda i: (0, 0)),    # b (broadcast)
            ],
            out_specs=pl.BlockSpec((br, D), lambda i: (i, 0)),
        ),
        compiler_params=pltpu.CompilerParams(
            dimension_semantics=("parallel",),
            # 2 x (in + out) double-buffered 6 MiB blocks + per-chunk temps
            # comfortably fits; 48 MiB stays inside v7x's 64 MiB physical VMEM.
            vmem_limit_bytes=48 * 1024 * 1024,
        ),
    )(x2, w2, b2)
    return out.reshape(B, S, D)


def layernorm_reference(x, w, b, eps=1e-5):
    xf = x.astype(jnp.float32)
    mean = jnp.mean(xf, axis=-1, keepdims=True)
    centered = xf - mean
    scale = jnp.sqrt(jnp.mean(centered * centered, axis=-1, keepdims=True) + eps)
    return (centered / scale * w.astype(jnp.float32)
            + b.astype(jnp.float32)).astype(x.dtype)


if __name__ == "__main__":
    # Small shapes consistent with the module: d_model from the config (768),
    # tiny batch/seq.
    batch, seq, d_model = 2, 8, 768
    eps = 1e-5

    key = jax.random.PRNGKey(0)
    kx, kw, kb = jax.random.split(key, 3)

    x = jax.random.normal(kx, (batch, seq, d_model), dtype=jnp.float32)
    # Module initializes w=ones, b=zeros; use non-trivial values to exercise
    # the affine part as well.
    w = 1.0 + 0.02 * jax.random.normal(kw, (d_model,), dtype=jnp.float32)
    b = 0.02 * jax.random.normal(kb, (d_model,), dtype=jnp.float32)

    out = layernorm_forward(x, w, b, eps=eps)
    out = jax.block_until_ready(out)

    ref = layernorm_reference(x, w, b, eps=eps)
    assert out.shape == (batch, seq, d_model)
    assert jnp.allclose(out, ref, atol=1e-5, rtol=1e-5), "mismatch vs reference"

    print("KERNEL_OK")
</pallas_src>

<mosaic_0001>
module attributes {stable_mosaic.version = 11 : i64} {
  func.func @_layernorm_kernel(%arg0: i32, %arg1: memref<8x768xf32, #tpu.memory_space<vmem>>, %arg2: memref<1x768xf32, #tpu.memory_space<vmem>>, %arg3: memref<1x768xf32, #tpu.memory_space<vmem>>, %arg4: memref<8x768xf32, #tpu.memory_space<vmem>>) attributes {dimension_semantics = [#tpu.dimension_semantics<parallel>], iteration_bounds = array<i64: 2>, scalar_prefetch = 0 : i64, scratch_operands = 0 : i64, tpu.core_type = #tpu.core_type<tc>, window_params = [{transform_indices = @transform_0, window_bounds = array<i64: 8, 768>}, {pipeline_mode = #tpu.pipeline_mode<synchronous>, transform_indices = @transform_1, window_bounds = array<i64: 1, 768>}, {pipeline_mode = #tpu.pipeline_mode<synchronous>, transform_indices = @transform_2, window_bounds = array<i64: 1, 768>}, {transform_indices = @transform_3, window_bounds = array<i64: 8, 768>}]} {
    %c0 = arith.constant 0 : index
    %c0_0 = arith.constant 0 : index
    %0 = vector.load %arg2[%c0, %c0_0] : memref<1x768xf32, #tpu.memory_space<vmem>>, vector<1x768xf32>
    %c0_1 = arith.constant 0 : index
    %c0_2 = arith.constant 0 : index
    %1 = vector.load %arg3[%c0_1, %c0_2] : memref<1x768xf32, #tpu.memory_space<vmem>>, vector<1x768xf32>
    %c0_i32 = arith.constant 0 : i32
    %c8_i32 = arith.constant 8 : i32
    %2 = arith.muli %c0_i32, %c8_i32 : i32
    %3 = tpu.assume_multiple %2, 8 : i32
    %4 = arith.index_cast %3 : i32 to index
    %c0_3 = arith.constant 0 : index
    %5 = vector.load %arg1[%4, %c0_3] : memref<8x768xf32, #tpu.memory_space<vmem>>, vector<8x768xf32>
    %cst = arith.constant dense<0.000000e+00> : vector<8xf32>
    %6 = vector.multi_reduction <add>, %5, %cst [1] : vector<8x768xf32> to vector<8xf32>
    %7 = vector.shape_cast %6 : vector<8xf32> to vector<8x1xf32>
    %cst_4 = arith.constant 0.00130208337 : f32
    %8 = vector.broadcast %cst_4 : f32 to vector<8x1xf32>
    %9 = arith.mulf %7, %8 : vector<8x1xf32>
    %10 = vector.broadcast %9 : vector<8x1xf32> to vector<8x768xf32>
    %11 = arith.subf %5, %10 : vector<8x768xf32>
    %12 = arith.mulf %11, %11 : vector<8x768xf32>
    %cst_5 = arith.constant dense<0.000000e+00> : vector<8xf32>
    %13 = vector.multi_reduction <add>, %12, %cst_5 [1] : vector<8x768xf32> to vector<8xf32>
    %14 = vector.shape_cast %13 : vector<8xf32> to vector<8x1xf32>
    %cst_6 = arith.constant 0.00130208337 : f32
    %15 = vector.broadcast %cst_6 : f32 to vector<8x1xf32>
    %16 = arith.mulf %14, %15 : vector<8x1xf32>
    %cst_7 = arith.constant 9.99999974E-6 : f32
    %17 = vector.broadcast %cst_7 : f32 to vector<8x1xf32>
    %18 = arith.addf %16, %17 : vector<8x1xf32>
    %19 = math.rsqrt %18 : vector<8x1xf32>
    %20 = vector.broadcast %19 : vector<8x1xf32> to vector<8x768xf32>
    %21 = arith.mulf %11, %20 : vector<8x768xf32>
    %22 = vector.broadcast %0 : vector<1x768xf32> to vector<8x768xf32>
    %23 = arith.mulf %21, %22 : vector<8x768xf32>
    %24 = vector.broadcast %1 : vector<1x768xf32> to vector<8x768xf32>
    %25 = arith.addf %23, %24 : vector<8x768xf32>
    %26 = arith.index_cast %3 : i32 to index
    %c0_8 = arith.constant 0 : index
    %27 = vector.load %arg4[%26, %c0_8] : memref<8x768xf32, #tpu.memory_space<vmem>>, vector<8x768xf32>
    tpu.vector_store %arg4[%26, %c0_8], %25 {strides = array<i32>} : memref<8x768xf32, #tpu.memory_space<vmem>>, vector<8x768xf32>,
    %c1_i32 = arith.constant 1 : i32
    return
  }
  func.func @transform_0(%arg0: i32) -> (i32, i32) {
    %c0_i32 = arith.constant 0 : i32
    %c0_i32_0 = arith.constant 0 : i32
    return %arg0, %c0_i32 : i32, i32
  }
  func.func @transform_1(%arg0: i32) -> (i32, i32) {
    %c0_i32 = arith.constant 0 : i32
    %c0_i32_0 = arith.constant 0 : i32
    %c0_i32_1 = arith.constant 0 : i32
    return %c0_i32, %c0_i32_0 : i32, i32
  }
  func.func @transform_2(%arg0: i32) -> (i32, i32) {
    %c0_i32 = arith.constant 0 : i32
    %c0_i32_0 = arith.constant 0 : i32
    %c0_i32_1 = arith.constant 0 : i32
    return %c0_i32, %c0_i32_0 : i32, i32
  }
  func.func @transform_3(%arg0: i32) -> (i32, i32) {
    %c0_i32 = arith.constant 0 : i32
    %c0_i32_0 = arith.constant 0 : i32
    return %arg0, %c0_i32 : i32, i32
  }
}

</mosaic_0001>

<llo_original>
// kernel: tpu_custom_call.1
$region0: #{tpu_custom_call.1}
  #allocation0 [shape = 'u32[]', space=smem, size = 0x4, offset = 0x4, fixed_abs, tag = 'smem constant byte address 0x4 - core index']
  #allocation1 [shape = 'u32[144,128]{1,0:T(1,128)}', space=vmem, size = 0x12000, scoped, tag = 'internal scratch']
  %s0 = inlined_call_operand.hbm [shape: f32[16,768], index: 0, kind: input, shape index: {}]
  %s1 = inlined_call_operand.hbm [shape: f32[1,768], index: 1, kind: input, shape index: {}]
  %s2 = inlined_call_operand.hbm [shape: f32[1,768], index: 2, kind: input, shape index: {}]
  %s3 = inlined_call_operand.hbm [shape: f32[16,768], index: 3, kind: output, shape index: {}]
  %s4 = sld [smem:[#allocation0]]
  $region57: #{tpu_custom_call.1} parent=0
    _
  %s6 = ssub.s32 1, %s4
  %s7 = scalar_select 0, %s6, %s4
  $region1: #{tpu_custom_call.1} parent=0
    #allocation2 [shape = 'u8[49152]{0}', space=vmem, size = 0xc000, scoped, tag = 'input window, operand 0']
    #allocation3 [shape = 's32[2]{0}', space=sflag, size = 0x8, scoped, tag = 'scoped memory for tpu_custom_call.1']
    #allocation4 [shape = 's32[2]{0}', space=sflag, size = 0x8, scoped, tag = 'scoped memory for tpu_custom_call.1']
    #allocation5 [shape = 'u8[3072]{0}', space=vmem, size = 0xc00, scoped, tag = 'input window, operand 1, single buffered']
    #allocation6 [shape = 's32[1]{0}', space=sflag, size = 0x4, scoped, tag = 'scoped memory for tpu_custom_call.1']
    #allocation7 [shape = 'u8[3072]{0}', space=vmem, size = 0xc00, scoped, tag = 'input window, operand 2, single buffered']
    #allocation8 [shape = 'u8[49152]{0}', space=vmem, size = 0xc000, scoped, tag = 'output window, operand 0']
    %8 = vsyncpa [#allocation3], 0
    %s9 = scalar_lea.sflag [#allocation3], 1
    %10 = vsyncpa %s9, 0
    %11 = vsyncpa [#allocation6], 0
    %12 = vsyncpa [#allocation4], 0
    %s13 = scalar_lea.sflag [#allocation4], 1
    %14 = vsyncpa %s13, 0
    loop: start=0, step=1, limit=4
    $region2: #{tpu_custom_call.1} parent=1 // loop_pre_header
      _
    $region3: #{tpu_custom_call.1} parent=1 // loop_header
      %s16 = sphi 0, %s20
      %p17 = scmp.ge.s32.totalorder %s16, 4
      %s26 = sphi 0, %s28
      %s29 = sphi 0, %s26
      %s30 = sphi 0, %s29
      %s46 = sphi 0, %s30
      %s50 = sphi 0, %s50
      %s52 = sphi 0, %s50
      %s53 = sphi 0, %s52
      %s67 = sphi 0, %s53
      %s71 = sphi 0, %s71
      %s73 = sphi 0, %s71
      %s74 = sphi 0, %s73
      %s88 = sphi 0, %s74
      %s94 = sphi 0, %s96
      %s97 = sphi 0, %s94
      %s98 = sphi 0, %s97
      %s114 = sphi 0, %s98
    $region4: #{tpu_custom_call.1} parent=1 // loop_header_branch
      %19 = sbr.rel (%p17) target = $region8
    $region5: #{tpu_custom_call.1} parent=1 // loop_body
      %s21 = ssub.s32 %s16, 1
      %s22 = ssub.s32 %s16, 2
      %s23 = sadd.s32 %s16, 1
      %s24 = ssub.s32 %s16, %s23
      %p25 = scmp.eq.s32.totalorder %s24, 0
      %s27 = sadd.s32 %s26, 1
      %s28 = scalar_select %p25, %s26, %s27
      %p31 = pneg %p25
      %p32 = scmp.eq.s32.totalorder %s16, 1
      %p33 = por %p31, %p32
      %p34 = scmp.ne.s32.totalorder %s26, %s29
      %p35 = scmp.eq.s32.totalorder %s16, 0
      %p36 = por %p34, %p35
      %p37 = scmp.ne.s32.totalorder %s26, %s29
      %p38 = scmp.eq.s32.totalorder %s21, 1
      %p39 = por %p37, %p38
      %p40 = scmp.ne.s32.totalorder %s29, %s30
      %p41 = scmp.eq.s32.totalorder %s21, 0
      %p42 = por %p40, %p41
      %p43 = scmp.ne.s32.totalorder %s29, %s30
      %p44 = scmp.eq.s32.totalorder %s22, 1
      %p45 = por %p43, %p44
      %p47 = scmp.ne.s32.totalorder %s30, %s46
      %p48 = scmp.eq.s32.totalorder %s22, 0
      %p49 = por %p47, %p48
      %s51 = sadd.s32 %s50, 1
      %p54 = scmp.eq.s32.totalorder %s16, 1
      %p55 = scmp.ne.s32.totalorder %s50, %s52
      %p56 = scmp.eq.s32.totalorder %s16, 0
      %p57 = por %p55, %p56
      %p58 = scmp.ne.s32.totalorder %s50, %s52
      %p59 = scmp.eq.s32.totalorder %s21, 1
      %p60 = por %p58, %p59
      %p61 = scmp.ne.s32.totalorder %s52, %s53
      %p62 = scmp.eq.s32.totalorder %s21, 0
      %p63 = por %p61, %p62
      %p64 = scmp.ne.s32.totalorder %s52, %s53
      %p65 = scmp.eq.s32.totalorder %s22, 1
      %p66 = por %p64, %p65
      %p68 = scmp.ne.s32.totalorder %s53, %s67
      %p69 = scmp.eq.s32.totalorder %s22, 0
      %p70 = por %p68, %p69
      %s72 = sadd.s32 %s71, 1
      %p75 = scmp.eq.s32.totalorder %s16, 1
      %p76 = scmp.ne.s32.totalorder %s71, %s73
      %p77 = scmp.eq.s32.totalorder %s16, 0
      %p78 = por %p76, %p77
      %p79 = scmp.ne.s32.totalorder %s71, %s73
      %p80 = scmp.eq.s32.totalorder %s21, 1
      %p81 = por %p79, %p80
      %p82 = scmp.ne.s32.totalorder %s73, %s74
      %p83 = scmp.eq.s32.totalorder %s21, 0
      %p84 = por %p82, %p83
      %p85 = scmp.ne.s32.totalorder %s73, %s74
      %p86 = scmp.eq.s32.totalorder %s22, 1
      %p87 = por %p85, %p86
      %p89 = scmp.ne.s32.totalorder %s74, %s88
      %p90 = scmp.eq.s32.totalorder %s22, 0
      %p91 = por %p89, %p90
      %s92 = ssub.s32 %s16, %s23
      %p93 = scmp.eq.s32.totalorder %s92, 0
      %s95 = sadd.s32 %s94, 1
      %s96 = scalar_select %p93, %s94, %s95
      %p99 = pneg %p93
      %p100 = scmp.eq.s32.totalorder %s16, 1
      %p101 = por %p99, %p100
      %p102 = scmp.ne.s32.totalorder %s94, %s97
      %p103 = scmp.eq.s32.totalorder %s16, 0
      %p104 = por %p102, %p103
      %p105 = scmp.ne.s32.totalorder %s94, %s97
      %p106 = scmp.eq.s32.totalorder %s21, 1
      %p107 = por %p105, %p106
      %p108 = scmp.ne.s32.totalorder %s97, %s98
      %p109 = scmp.eq.s32.totalorder %s21, 0
      %p110 = por %p108, %p109
      %p111 = scmp.ne.s32.totalorder %s97, %s98
      %p112 = scmp.eq.s32.totalorder %s22, 1
      %p113 = por %p111, %p112
      %p115 = scmp.ne.s32.totalorder %s98, %s114
      %p116 = scmp.eq.s32.totalorder %s22, 0
      %p117 = por %p115, %p116
      %p118 = scmp.le.s32.totalorder 1, %s16
      %p119 = scmp.lt.s32.totalorder %s16, 3
      %p120 = pnand %p118, %p119
      %p121 = pneg %p120
      // Predicated region
      $region9: #{tpu_custom_call.1} parent=5 // pred_check
        _
      $region10: #{tpu_custom_call.1} parent=5 // pred_check_branch
        %123 = sbr.rel (%p120) target = $region12
      $region11: #{tpu_custom_call.1} parent=5 // pred_region
        %s124 = ssub.s32 %s16, 1
        // Predicated region
        $region13: #{tpu_custom_call.1} parent=11 // pred_check
          %p125 = pneg %p63
        $region14: #{tpu_custom_call.1} parent=11 // pred_check_branch
          %127 = sbr.rel (%p125) target = $region16
        $region15: #{tpu_custom_call.1} parent=11 // pred_region
          %s129 = ssub.s32 96, 96
          %130 = vsyncadd [#allocation6], %s129
          %s132 = sshll.u32 [#allocation5], 4
          %s133 = int_to_ptr.vmem [resolvable:$true] %s132
          %135 = dma.hbm_to_vmem [thread:$0]  %s1, 96, %s133, [#allocation6]
        $region16: #{tpu_custom_call.1} parent=11 // pred_fallthru
          _
        // Predicated region
        $region17: #{tpu_custom_call.1} parent=11 // pred_check
          %p136 = pneg %p84
        $region18: #{tpu_custom_call.1} parent=11 // pred_check_branch
          %138 = sbr.rel (%p136) target = $region20
        $region19: #{tpu_custom_call.1} parent=11 // pred_region
          %s140 = ssub.s32 96, 96
          %141 = vsyncadd [#allocation6], %s140
          %s143 = sshll.u32 [#allocation7], 4
          %s144 = int_to_ptr.vmem [resolvable:$true] %s143
          %146 = dma.hbm_to_vmem [thread:$0]  %s2, 96, %s144, [#allocation6]
        $region20: #{tpu_custom_call.1} parent=11 // pred_fallthru
          _
      $region12: #{tpu_custom_call.1} parent=5 // pred_fallthru
        _
      %p147 = scmp.lt.s32.totalorder %s16, 2
      // Predicated region
      $region21: #{tpu_custom_call.1} parent=5 // pred_check
        %p148 = pneg %p147
      $region22: #{tpu_custom_call.1} parent=5 // pred_check_branch
        %150 = sbr.rel (%p148) target = $region24
      $region23: #{tpu_custom_call.1} parent=5 // pred_region
        // Predicated region
        $region25: #{tpu_custom_call.1} parent=23 // pred_check
          %p151 = pneg %p36
        $region26: #{tpu_custom_call.1} parent=23 // pred_check_branch
          %153 = sbr.rel (%p151) target = $region28
        $region27: #{tpu_custom_call.1} parent=23 // pred_region
          %s154 = sand.u32 %s26, 1
          %s155 = scalar_lea.sflag [#allocation3], %s154
          %s156 = sand.u32 %s26, 1
          %s157 = smul.addr %s156, 48
          %s158 = scalar_lea.vmem [#allocation2], %s157
          %s160 = ssub.s32 768, 768
          %161 = vsyncadd %s155, %s160
          %s162 = smul.addr %s16, 6
          %s163 = smul.addr %s162, 128
          %s164 = scalar_lea.hbm %s0, %s163
          %s166 = sshll.u32 %s158, 4
          %s167 = int_to_ptr.vmem [resolvable:$true] %s166
          %169 = dma.hbm_to_vmem [thread:$0]  %s164, 768, %s167, %s155
        $region28: #{tpu_custom_call.1} parent=23 // pred_fallthru
          _
      $region24: #{tpu_custom_call.1} parent=5 // pred_fallthru
        _
      %p170 = scmp.le.s32.totalorder 1, %s16
      %p171 = scmp.lt.s32.totalorder %s16, 3
      %p172 = pnand %p170, %p171
      %p173 = pneg %p172
      // Predicated region
      $region29: #{tpu_custom_call.1} parent=5 // pred_check
        _
      $region30: #{tpu_custom_call.1} parent=5 // pred_check_branch
        %175 = sbr.rel (%p172) target = $region32
      $region31: #{tpu_custom_call.1} parent=5 // pred_region
        %s176 = ssub.s32 %s16, 1
        %s177 = sand.u32 %s29, 1
        %s178 = scalar_lea.sflag [#allocation3], %s177
        %s179 = sand.u32 %s29, 1
        %s180 = smul.addr %s179, 48
        %s181 = scalar_lea.vmem [#allocation2], %s180
        // Predicated region
        $region33: #{tpu_custom_call.1} parent=31 // pred_check
          %p182 = pneg %p42
        $region34: #{tpu_custom_call.1} parent=31 // pred_check_branch
          %184 = sbr.rel (%p182) target = $region36
        $region35: #{tpu_custom_call.1} parent=31 // pred_region
          %185 = dma.done %s178, 768
        $region36: #{tpu_custom_call.1} parent=31 // pred_fallthru
          _
        // Predicated region
        $region37: #{tpu_custom_call.1} parent=31 // pred_check
          %p186 = pneg %p63
        $region38: #{tpu_custom_call.1} parent=31 // pred_check_branch
          %188 = sbr.rel (%p186) target = $region40
        $region39: #{tpu_custom_call.1} parent=31 // pred_region
          %189 = dma.done [#allocation6], 96
        $region40: #{tpu_custom_call.1} parent=31 // pred_fallthru
          _
        // Predicated region
        $region41: #{tpu_custom_call.1} parent=31 // pred_check
          %p190 = pneg %p84
        $region42: #{tpu_custom_call.1} parent=31 // pred_check_branch
          %192 = sbr.rel (%p190) target = $region44
        $region43: #{tpu_custom_call.1} parent=31 // pred_region
          %193 = dma.done [#allocation6], 96
        $region44: #{tpu_custom_call.1} parent=31 // pred_fallthru
          _
        %s194 = sand.u32 %s29, 1
        %s195 = scalar_lea.sflag [#allocation3], %s194
        %s196 = sand.u32 %s29, 1
        %s197 = smul.addr %s196, 48
        %s198 = scalar_lea.vmem [#allocation2], %s197
        %p199 = pneg %p42
        %p200 = pneg %p39
        %p201 = pneg %p63
        %p202 = pneg %p60
        %p203 = pneg %p84
        %p204 = pneg %p81
        %p205 = pneg %p110
        %p206 = pneg %p107
        %s207 = sand.u32 %s97, 1
        %s208 = scalar_lea.sflag [#allocation4], %s207
        %s209 = sand.u32 %s97, 1
        %s210 = smul.addr %s209, 48
        %s211 = scalar_lea.vmem [#allocation8], %s210
        %v212 = vld [vmem:[#allocation5] sm:$0x3f]
        %v213 = vld [vmem:[#allocation7] sm:$0x3f]
        %s214 = smul.u32 0, 6
        %s215 = smul.addr %s214, 8
        %s216 = scalar_lea.vmem %s181, %s215 [#allocation2]
        %v217 = vld [vmem:[%s216] sm:$0xff]
        %v218 = vld [vmem:[%s216 + $0x8] sm:$0xff]
        %v219 = vld [vmem:[%s216 + $0x10] sm:$0xff]
        %v220 = vld [vmem:[%s216 + $0x18] sm:$0xff]
        %v221 = vld [vmem:[%s216 + $0x20] sm:$0xff]
        %v222 = vld [vmem:[%s216 + $0x28] sm:$0xff]
        %v223 = vadd.f32 %v217, %v218
        %v224 = vadd.f32 %v223, %v219
        %v225 = vadd.f32 %v224, %v220
        %v226 = vadd.f32 %v225, %v221
        %v227 = vadd.f32 %v226, %v222
        %228 = vadd.xlane.f32.xlu0 %v227
        %v229 = vpop.xlane.xlu0 %228
        %v230 = vmul.f32 %v229, 0.0013020834
        %v231 = vsub.f32 %v217, %v230
        %v232 = vsub.f32 %v218, %v230
        %v233 = vsub.f32 %v219, %v230
        %v234 = vsub.f32 %v220, %v230
        %v235 = vsub.f32 %v221, %v230
        %v236 = vsub.f32 %v222, %v230
        %v237 = vmul.f32 %v231, %v231
        %v238 = vmul.f32 %v232, %v232
        %v239 = vmul.f32 %v233, %v233
        %v240 = vmul.f32 %v234, %v234
        %v241 = vmul.f32 %v235, %v235
        %v242 = vmul.f32 %v236, %v236
        %v243 = vadd.f32 %v237, %v238
        %v244 = vadd.f32 %v243, %v239
        %v245 = vadd.f32 %v244, %v240
        %v246 = vadd.f32 %v245, %v241
        %v247 = vadd.f32 %v246, %v242
        %248 = vadd.xlane.f32.xlu0 %v247
        %v249 = vpop.xlane.xlu0 %248
        %v250 = vmul.f32 %v249, 0.0013020834
        %v251 = vadd.f32 %v250, 1e-05
        %v252 = vrsqrt.pop %v251
        %v253 = vmul.f32 %v231, %v252
        %v254 = vmul.f32 %v232, %v252
        %v255 = vmul.f32 %v233, %v252
        %v256 = vmul.f32 %v234, %v252
        %v257 = vmul.f32 %v235, %v252
        %v258 = vmul.f32 %v236, %v252
        %v260 = vlaneseq
        %v261 = vshrl.u32 %v260, 7
        %v262 = vsub.s32 0, %v261
        %v263 = vrot.slane %v212, %v262
        %v264 = vlaneseq
        %v265 = vshrl.u32 %v264, 7
        %v266 = vsub.s32 1, %v265
        %v267 = vrot.slane %v212, %v266
        %v268 = vlaneseq
        %v269 = vshrl.u32 %v268, 7
        %v270 = vsub.s32 2, %v269
        %v271 = vrot.slane %v212, %v270
        %v272 = vlaneseq
        %v273 = vshrl.u32 %v272, 7
        %v274 = vsub.s32 3, %v273
        %v275 = vrot.slane %v212, %v274
        %v276 = vlaneseq
        %v277 = vshrl.u32 %v276, 7
        %v278 = vsub.s32 4, %v277
        %v279 = vrot.slane %v212, %v278
        %v280 = vlaneseq
        %v281 = vshrl.u32 %v280, 7
        %v282 = vsub.s32 5, %v281
        %v283 = vrot.slane %v212, %v282
        %v290 = vmul.f32 %v253, %v263
        %v291 = vmul.f32 %v254, %v267
        %v292 = vmul.f32 %v255, %v271
        %v293 = vmul.f32 %v256, %v275
        %v294 = vmul.f32 %v257, %v279
        %v295 = vmul.f32 %v258, %v283
        %v297 = vlaneseq
        %v298 = vshrl.u32 %v297, 7
        %v299 = vsub.s32 0, %v298
        %v300 = vrot.slane %v213, %v299
        %v301 = vlaneseq
        %v302 = vshrl.u32 %v301, 7
        %v303 = vsub.s32 1, %v302
        %v304 = vrot.slane %v213, %v303
        %v305 = vlaneseq
        %v306 = vshrl.u32 %v305, 7
        %v307 = vsub.s32 2, %v306
        %v308 = vrot.slane %v213, %v307
        %v309 = vlaneseq
        %v310 = vshrl.u32 %v309, 7
        %v311 = vsub.s32 3, %v310
        %v312 = vrot.slane %v213, %v311
        %v313 = vlaneseq
        %v314 = vshrl.u32 %v313, 7
        %v315 = vsub.s32 4, %v314
        %v316 = vrot.slane %v213, %v315
        %v317 = vlaneseq
        %v318 = vshrl.u32 %v317, 7
        %v319 = vsub.s32 5, %v318
        %v320 = vrot.slane %v213, %v319
        %v327 = vadd.f32 %v290, %v300
        %v328 = vadd.f32 %v291, %v304
        %v329 = vadd.f32 %v292, %v308
        %v330 = vadd.f32 %v293, %v312
        %v331 = vadd.f32 %v294, %v316
        %v332 = vadd.f32 %v295, %v320
        %s333 = smul.addr %s214, 8
        %s334 = scalar_lea.vmem %s211, %s333 [#allocation8]
        %335 = vst [vmem:[%s334] sm:$0xff] %v327
        %336 = vst [vmem:[%s334 + $0x8] sm:$0xff] %v328
        %337 = vst [vmem:[%s334 + $0x10] sm:$0xff] %v329
        %338 = vst [vmem:[%s334 + $0x18] sm:$0xff] %v330
        %339 = vst [vmem:[%s334 + $0x20] sm:$0xff] %v331
        %340 = vst [vmem:[%s334 + $0x28] sm:$0xff] %v332
        %s341 = sand.u32 %s97, 1
        %s342 = scalar_lea.sflag [#allocation4], %s341
        %s343 = sand.u32 %s97, 1
        %s344 = smul.addr %s343, 48
        %s345 = scalar_lea.vmem [#allocation8], %s344
        // Predicated region
        $region45: #{tpu_custom_call.1} parent=31 // pred_check
          %p346 = pneg %p107
        $region46: #{tpu_custom_call.1} parent=31 // pred_check_branch
          %348 = sbr.rel (%p346) target = $region48
        $region47: #{tpu_custom_call.1} parent=31 // pred_region
          %s350 = ssub.s32 768, 768
          %351 = vsyncadd %s342, %s350
          %s352 = smul.addr %s21, 6
          %s353 = smul.addr %s352, 128
          %s354 = scalar_lea.hbm %s3, %s353
          %s356 = sshll.u32 %s345, 4
          %s357 = int_to_ptr.vmem [resolvable:$true] %s356
          %359 = dma.vmem_to_hbm [thread:$0]  %s357, 768, %s354, %s342
        $region48: #{tpu_custom_call.1} parent=31 // pred_fallthru
          _
      $region32: #{tpu_custom_call.1} parent=5 // pred_fallthru
        _
      %p360 = scmp.le.s32.totalorder 2, %s16
      // Predicated region
      $region49: #{tpu_custom_call.1} parent=5 // pred_check
        %p361 = pneg %p360
      $region50: #{tpu_custom_call.1} parent=5 // pred_check_branch
        %363 = sbr.rel (%p361) target = $region52
      $region51: #{tpu_custom_call.1} parent=5 // pred_region
        %s364 = ssub.s32 %s16, 2
        // Predicated region
        $region53: #{tpu_custom_call.1} parent=51 // pred_check
          %p365 = pneg %p113
        $region54: #{tpu_custom_call.1} parent=51 // pred_check_branch
          %367 = sbr.rel (%p365) target = $region56
        $region55: #{tpu_custom_call.1} parent=51 // pred_region
          %s368 = sand.u32 %s98, 1
          %s369 = scalar_lea.sflag [#allocation4], %s368
          %s370 = sand.u32 %s98, 1
          %s371 = smul.addr %s370, 48
          %s372 = scalar_lea.vmem [#allocation8], %s371
          %373 = dma.done %s369, 768
        $region56: #{tpu_custom_call.1} parent=51 // pred_fallthru
          _
      $region52: #{tpu_custom_call.1} parent=5 // pred_fallthru
        _
    $region6: #{tpu_custom_call.1} parent=1 // loop_footer
      %s20 = sadd.s32 1, %s16
    $region7: #{tpu_custom_call.1} parent=1 // loop_footer_branch
      %15 = sbr.rel target = $region3
    $region8: #{tpu_custom_call.1} parent=1 // loop_exit
      _
    %374 = vsyncpa [#allocation3], 1
    %s375 = scalar_lea.sflag [#allocation3], 1
    %376 = vsyncpa %s375, 1
    %377 = vsyncpa [#allocation6], 1
    %378 = vsyncpa [#allocation4], 1
    %s379 = scalar_lea.sflag [#allocation4], 1
    %380 = vsyncpa %s379, 1

</llo_original>
